<compile_context>
chip_gen: v6e
topology: v6e:2x2x1
jax: 0.10.0
libtpu: 0.0.40
codegen_flags: <defaults>
</compile_context>

<pallas_src>
import functools

import jax
import jax.numpy as jnp
from jax.experimental import pallas as pl
from jax.experimental.pallas import tpu as pltpu


def channel_grouping_kernel(x_ref, w1t_ref, b1_ref, w2t_ref, b2_ref,
                            g_ref, weighted_ref, *, part_num, channel_num):
    # Load the (Bb, C, S) block exactly once.
    x = x_ref[...]

    # Global average pool over spatial -> (Bb, C).
    pooled = jnp.mean(x, axis=-1)

    # fc1 + sigmoid: batched matmul, M = Bb rows on the MXU.
    h = jax.nn.sigmoid(
        jnp.dot(pooled, w1t_ref[...], preferred_element_type=jnp.float32)
        + b1_ref[...])

    # fc2 + sigmoid -> (Bb, P*C).
    g = jax.nn.sigmoid(
        jnp.dot(h, w2t_ref[...], preferred_element_type=jnp.float32)
        + b2_ref[...])

    # Lane-dense store of the grouping result: last dim P*C = 128 lanes,
    # single unmasked vst per sublane row. Reshape to (B, P, C) in wrapper.
    g_ref[...] = g.astype(g_ref.dtype)

    # weighted[b, p, s] = mean_c grouping[b, p, c] * x[b, c, s]
    # == (1/C) * (grouping[b] @ x[b]); fold the 1/C into the small operand.
    grouping = g.reshape(g.shape[0], part_num, channel_num) * (1.0 / channel_num)
    weighted = jnp.einsum('bpc,bcs->bps', grouping, x,
                          preferred_element_type=jnp.float32)
    weighted_ref[...] = weighted.astype(weighted_ref.dtype)


def channel_grouping_forward(x, w1, b1, w2, b2, part_num):
    B, C, H, W = x.shape
    S = H * W
    hidden = w1.shape[0]
    PC = part_num * C

    x_flat = x.reshape(B, C, S)
    w1t = jnp.transpose(w1)                 # (C, hidden)
    w2t = jnp.transpose(w2)                 # (hidden, P*C)
    b1r = b1.reshape(1, hidden)
    b2r = b2.reshape(1, PC)

    # Fold the whole batch into one block when it is small; block the batch
    # (parallel grid axis, megacore-shardable) only when it is large. The
    # per-step double-buffered footprint stays far below the v7x 64 MiB /
    # default 16-32 MiB scoped VMEM limits for these shapes.
    b_blk = B if B <= 128 else 128
    grid = (pl.cdiv(B, b_blk),)

    cost = pl.CostEstimate(
        flops=2 * B * (C * hidden + hidden * PC + part_num * C * S) + B * C * S,
        transcendentals=B * (hidden + PC),
        bytes_accessed=4 * (B * C * S + C * hidden + hidden + hidden * PC + PC
                            + B * PC + B * part_num * S),
    )

    kernel = functools.partial(channel_grouping_kernel,
                               part_num=part_num, channel_num=C)

    g_flat, weighted = pl.pallas_call(
        kernel,
        out_shape=(jax.ShapeDtypeStruct((B, PC), x.dtype),
                   jax.ShapeDtypeStruct((B, part_num, S), x.dtype)),
        grid=grid,
        in_specs=[
            pl.BlockSpec((b_blk, C, S), lambda b: (b, 0, 0)),
            pl.BlockSpec((C, hidden), lambda b: (0, 0)),
            pl.BlockSpec((1, hidden), lambda b: (0, 0)),
            pl.BlockSpec((hidden, PC), lambda b: (0, 0)),
            pl.BlockSpec((1, PC), lambda b: (0, 0)),
        ],
        out_specs=(
            pl.BlockSpec((b_blk, PC), lambda b: (b, 0)),
            pl.BlockSpec((b_blk, part_num, S), lambda b: (b, 0, 0)),
        ),
        compiler_params=pltpu.CompilerParams(
            dimension_semantics=("parallel",)),
        cost_estimate=cost,
    )(x_flat, w1t, b1r, w2t, b2r)

    grouping = g_flat.reshape(B, part_num, C)        # == torch unfold(-1, C, C)
    weighted = weighted.reshape(B, part_num, H, W)
    return grouping, weighted


def reference_forward(x, w1, b1, w2, b2, part_num):
    B, C, H, W = x.shape
    pooled = jnp.mean(x, axis=(2, 3))                              # (B, C)
    h = jax.nn.sigmoid(pooled @ w1.T + b1)                         # (B, hidden)
    g = jax.nn.sigmoid(h @ w2.T + b2)                              # (B, P*C)
    grouping = g.reshape(B, part_num, C)                           # (B, P, C)
    weighted = jnp.einsum('bpc,bchw->bphw', grouping, x) / C       # (B, P, H, W)
    return grouping, weighted


if __name__ == "__main__":
    part_num = 4
    channel_num = 32
    hidden = channel_num * part_num // 2     # 64
    B, H, W = 2, 14, 14                      # spatial must be 14x14 (S = 196)

    key = jax.random.PRNGKey(0)
    kx, k1, k2, k3, k4 = jax.random.split(key, 5)

    x = jax.random.normal(kx, (B, channel_num, H, W), dtype=jnp.float32)

    # deterministic PyTorch-Linear-style init: U(-1/sqrt(fan_in), 1/sqrt(fan_in))
    bound1 = 1.0 / (channel_num ** 0.5)
    w1 = jax.random.uniform(k1, (hidden, channel_num), jnp.float32, -bound1, bound1)
    b1 = jax.random.uniform(k2, (hidden,), jnp.float32, -bound1, bound1)
    bound2 = 1.0 / (hidden ** 0.5)
    w2 = jax.random.uniform(k3, (channel_num * part_num, hidden), jnp.float32,
                            -bound2, bound2)
    b2 = jax.random.uniform(k4, (channel_num * part_num,), jnp.float32,
                            -bound2, bound2)

    grouping, weighted = channel_grouping_forward(x, w1, b1, w2, b2, part_num)
    jax.block_until_ready((grouping, weighted))

    g_ref, w_ref = reference_forward(x, w1, b1, w2, b2, part_num)
    assert grouping.shape == (B, part_num, channel_num)
    assert weighted.shape == (B, part_num, H, W)
    assert jnp.allclose(grouping, g_ref, atol=1e-4, rtol=1e-4)
    assert jnp.allclose(weighted, w_ref, atol=1e-4, rtol=1e-4)

    print("KERNEL_OK")
</pallas_src>

<mosaic_0001>
module attributes {stable_mosaic.version = 11 : i64} {
  func.func @channel_grouping_kernel(%arg0: i32, %arg1: memref<2x32x196xf32, #tpu.memory_space<vmem>>, %arg2: memref<32x64xf32, #tpu.memory_space<vmem>>, %arg3: memref<1x64xf32, #tpu.memory_space<vmem>>, %arg4: memref<64x128xf32, #tpu.memory_space<vmem>>, %arg5: memref<1x128xf32, #tpu.memory_space<vmem>>, %arg6: memref<2x128xf32, #tpu.memory_space<vmem>>, %arg7: memref<2x4x196xf32, #tpu.memory_space<vmem>>) attributes {dimension_semantics = [#tpu.dimension_semantics<parallel>], iteration_bounds = array<i64: 1>, scalar_prefetch = 0 : i64, scratch_operands = 0 : i64, tpu.core_type = #tpu.core_type<tc>, window_params = [{transform_indices = @transform_0, window_bounds = array<i64: 2, 32, 196>}, {pipeline_mode = #tpu.pipeline_mode<synchronous>, transform_indices = @transform_1, window_bounds = array<i64: 32, 64>}, {pipeline_mode = #tpu.pipeline_mode<synchronous>, transform_indices = @transform_2, window_bounds = array<i64: 1, 64>}, {pipeline_mode = #tpu.pipeline_mode<synchronous>, transform_indices = @transform_3, window_bounds = array<i64: 64, 128>}, {pipeline_mode = #tpu.pipeline_mode<synchronous>, transform_indices = @transform_4, window_bounds = array<i64: 1, 128>}, {transform_indices = @transform_5, window_bounds = array<i64: 2, 128>}, {transform_indices = @transform_6, window_bounds = array<i64: 2, 4, 196>}]} {
    %c0 = arith.constant 0 : index
    %c0_0 = arith.constant 0 : index
    %c0_1 = arith.constant 0 : index
    %0 = vector.load %arg1[%c0, %c0_0, %c0_1] : memref<2x32x196xf32, #tpu.memory_space<vmem>>, vector<2x32x196xf32>
    %cst = arith.constant dense<0.000000e+00> : vector<2x32xf32>
    %1 = vector.multi_reduction <add>, %0, %cst [2] : vector<2x32x196xf32> to vector<2x32xf32>
    %cst_2 = arith.constant 1.960000e+02 : f32
    %2 = vector.broadcast %cst_2 : f32 to vector<2x32xf32>
    %3 = arith.divf %1, %2 : vector<2x32xf32>
    %c0_3 = arith.constant 0 : index
    %c0_4 = arith.constant 0 : index
    %4 = vector.load %arg2[%c0_3, %c0_4] : memref<32x64xf32, #tpu.memory_space<vmem>>, vector<32x64xf32>
    %cst_5 = arith.constant dense<0.000000e+00> : vector<2x64xf32>
    %5 = tpu.matmul %3, %4, %cst_5 {dimension_numbers = #tpu.dot_dimension_numbers<[1], [0], [0], [1], [0, 0, 1, 1], [], []>} : vector<2x32xf32>, vector<32x64xf32>, vector<2x64xf32> -> vector<2x64xf32>
    %c0_6 = arith.constant 0 : index
    %c0_7 = arith.constant 0 : index
    %6 = vector.load %arg3[%c0_6, %c0_7] : memref<1x64xf32, #tpu.memory_space<vmem>>, vector<1x64xf32>
    %7 = vector.broadcast %6 : vector<1x64xf32> to vector<2x64xf32>
    %8 = arith.addf %5, %7 : vector<2x64xf32>
    %9 = arith.negf %8 : vector<2x64xf32>
    %10 = math.exp %9 : vector<2x64xf32>
    %cst_8 = arith.constant 1.000000e+00 : f32
    %11 = vector.broadcast %cst_8 : f32 to vector<2x64xf32>
    %12 = arith.addf %11, %10 : vector<2x64xf32>
    %13 = arith.divf %11, %12 : vector<2x64xf32>
    %c0_9 = arith.constant 0 : index
    %c0_10 = arith.constant 0 : index
    %14 = vector.load %arg4[%c0_9, %c0_10] : memref<64x128xf32, #tpu.memory_space<vmem>>, vector<64x128xf32>
    %cst_11 = arith.constant dense<0.000000e+00> : vector<2x128xf32>
    %15 = tpu.matmul %13, %14, %cst_11 {dimension_numbers = #tpu.dot_dimension_numbers<[1], [0], [0], [1], [0, 0, 1, 1], [], []>} : vector<2x64xf32>, vector<64x128xf32>, vector<2x128xf32> -> vector<2x128xf32>
    %c0_12 = arith.constant 0 : index
    %c0_13 = arith.constant 0 : index
    %16 = vector.load %arg5[%c0_12, %c0_13] : memref<1x128xf32, #tpu.memory_space<vmem>>, vector<1x128xf32>
    %17 = vector.broadcast %16 : vector<1x128xf32> to vector<2x128xf32>
    %18 = arith.addf %15, %17 : vector<2x128xf32>
    %19 = arith.negf %18 : vector<2x128xf32>
    %20 = math.exp %19 : vector<2x128xf32>
    %cst_14 = arith.constant 1.000000e+00 : f32
    %21 = vector.broadcast %cst_14 : f32 to vector<2x128xf32>
    %22 = arith.addf %21, %20 : vector<2x128xf32>
    %23 = arith.divf %21, %22 : vector<2x128xf32>
    %c0_15 = arith.constant 0 : index
    %c0_16 = arith.constant 0 : index
    %24 = vector.load %arg6[%c0_15, %c0_16] : memref<2x128xf32, #tpu.memory_space<vmem>>, vector<2x128xf32>
    tpu.vector_store %arg6[%c0_15, %c0_16], %23 {strides = array<i32>} : memref<2x128xf32, #tpu.memory_space<vmem>>, vector<2x128xf32>,
    %25 = vector.shape_cast %23 : vector<2x128xf32> to vector<2x4x32xf32>
    %cst_17 = arith.constant 3.125000e-02 : f32
    %26 = vector.broadcast %cst_17 : f32 to vector<2x4x32xf32>
    %27 = arith.mulf %25, %26 : vector<2x4x32xf32>
    "tpu.trace_start"() <{level = 10 : i32, message = "bpc,bcs->bps"}> : () -> ()
    %cst_18 = arith.constant dense<0.000000e+00> : vector<2x4x196xf32>
    %28 = tpu.matmul %27, %0, %cst_18 {dimension_numbers = #tpu.dot_dimension_numbers<[2], [1], [1], [2], [0, 0, 0, 1, 1, 2], [0], [0]>} : vector<2x4x32xf32>, vector<2x32x196xf32>, vector<2x4x196xf32> -> vector<2x4x196xf32>
    "tpu.trace_stop"() : () -> ()
    %c0_19 = arith.constant 0 : index
    %c0_20 = arith.constant 0 : index
    %c0_21 = arith.constant 0 : index
    %29 = vector.load %arg7[%c0_19, %c0_20, %c0_21] : memref<2x4x196xf32, #tpu.memory_space<vmem>>, vector<2x4x196xf32>
    tpu.vector_store %arg7[%c0_19, %c0_20, %c0_21], %28 {strides = array<i32>} : memref<2x4x196xf32, #tpu.memory_space<vmem>>, vector<2x4x196xf32>,
    return
  }
  func.func @transform_0(%arg0: i32) -> (i32, i32, i32) {
    %c0_i32 = arith.constant 0 : i32
    %c0_i32_0 = arith.constant 0 : i32
    %c0_i32_1 = arith.constant 0 : i32
    return %arg0, %c0_i32, %c0_i32_0 : i32, i32, i32
  }
  func.func @transform_1(%arg0: i32) -> (i32, i32) {
    %c0_i32 = arith.constant 0 : i32
    %c0_i32_0 = arith.constant 0 : i32
    %c0_i32_1 = arith.constant 0 : i32
    return %c0_i32, %c0_i32_0 : i32, i32
  }
  func.func @transform_2(%arg0: i32) -> (i32, i32) {
    %c0_i32 = arith.constant 0 : i32
    %c0_i32_0 = arith.constant 0 : i32
    %c0_i32_1 = arith.constant 0 : i32
    return %c0_i32, %c0_i32_0 : i32, i32
  }
  func.func @transform_3(%arg0: i32) -> (i32, i32) {
    %c0_i32 = arith.constant 0 : i32
    %c0_i32_0 = arith.constant 0 : i32
    %c0_i32_1 = arith.constant 0 : i32
    return %c0_i32, %c0_i32_0 : i32, i32
  }
  func.func @transform_4(%arg0: i32) -> (i32, i32) {
    %c0_i32 = arith.constant 0 : i32
    %c0_i32_0 = arith.constant 0 : i32
    %c0_i32_1 = arith.constant 0 : i32
    return %c0_i32, %c0_i32_0 : i32, i32
  }
  func.func @transform_5(%arg0: i32) -> (i32, i32) {
    %c0_i32 = arith.constant 0 : i32
    %c0_i32_0 = arith.constant 0 : i32
    return %arg0, %c0_i32 : i32, i32
  }
  func.func @transform_6(%arg0: i32) -> (i32, i32, i32) {
    %c0_i32 = arith.constant 0 : i32
    %c0_i32_0 = arith.constant 0 : i32
    %c0_i32_1 = arith.constant 0 : i32
    return %arg0, %c0_i32, %c0_i32_0 : i32, i32, i32
  }
}

</mosaic_0001>

<llo_original>
// kernel: tpu_custom_call.1
$region0: #{tpu_custom_call.1}
  #allocation0 [shape = 'u32[]', space=smem, size = 0x4, offset = 0x4, fixed_abs, tag = 'smem constant byte address 0x4 - core index']
  #allocation1 [shape = 'u32[144,128]{1,0:T(1,128)}', space=vmem, size = 0x12000, scoped, tag = 'internal scratch']
  %s0 = inlined_call_operand.hbm [shape: f32[2,32,196], index: 0, kind: input, shape index: {}]
  %s1 = inlined_call_operand.hbm [shape: f32[32,64], index: 1, kind: input, shape index: {}]
  %s2 = inlined_call_operand.vmem [shape: f32[1,64], index: 2, kind: input, shape index: {}]
  %s3 = inlined_call_operand.hbm [shape: f32[64,128], index: 3, kind: input, shape index: {}]
  %s4 = inlined_call_operand.vmem [shape: f32[1,128], index: 4, kind: input, shape index: {}]
  %s5 = inlined_call_operand.hbm [shape: f32[2,128], index: 5, kind: output, shape index: {0}]
  %s6 = inlined_call_operand.hbm [shape: f32[2,4,196], index: 6, kind: output, shape index: {1}]
  %7 = xla_tuple %s5, %s6
  %s8 = sld [smem:[#allocation0]]
  $region50: #{tpu_custom_call.1} parent=0
    _
  %s10 = ssub.s32 1, %s8
  %s11 = scalar_select 0, %s10, %s8
  $region1: #{tpu_custom_call.1} parent=0
    #allocation2 [shape = 'u8[65536]{0}', space=vmem, size = 0x10000, scoped, tag = 'input window, operand 0, single buffered']
    #allocation3 [shape = 's32[1]{0}', space=sflag, size = 0x4, scoped, tag = 'scoped memory for tpu_custom_call.1']
    #allocation4 [shape = 's32[1]{0}', space=sflag, size = 0x4, scoped, tag = 'scoped memory for tpu_custom_call.1']
    #allocation5 [shape = 'u8[16384]{0}', space=vmem, size = 0x4000, scoped, tag = 'input window, operand 1, single buffered']
    #allocation6 [shape = 's32[1]{0}', space=sflag, size = 0x4, scoped, tag = 'scoped memory for tpu_custom_call.1']
    #allocation7 [shape = 'u8[32768]{0}', space=vmem, size = 0x8000, scoped, tag = 'input window, operand 3, single buffered']
    #allocation8 [shape = 'u8[1024]{0}', space=vmem, size = 0x400, scoped, tag = 'output window, operand 0, single buffered']
    #allocation9 [shape = 'u8[8192]{0}', space=vmem, size = 0x2000, scoped, tag = 'output window, operand 1, single buffered']
    #allocation10 [shape = 's32[1]{0}', space=sflag, size = 0x4, scoped, tag = 'scoped memory for tpu_custom_call.1']
    %12 = vsyncpa [#allocation3], 0
    %13 = vsyncpa [#allocation6], 0
    %14 = vsyncpa [#allocation4], 0
    %15 = vsyncpa [#allocation10], 0
    // Predicated region
    $region2: #{tpu_custom_call.1} parent=1 // pred_check
      _
    $region3: #{tpu_custom_call.1} parent=1 // pred_check_branch
      %17 = sbr.rel (0) target = $region5
    $region4: #{tpu_custom_call.1} parent=1 // pred_region
      %s19 = ssub.s32 2048, 2048
      %20 = vsyncadd [#allocation3], %s19
      %s21 = sshll.u32 [#allocation2], 4
      %s22 = int_to_ptr.vmem [resolvable:$true] %s21
      %27 = dma.hbm_to_vmem [thread:$0]  %s0, 2048, %s22, [#allocation3], 256, 256, 16
    $region5: #{tpu_custom_call.1} parent=1 // pred_fallthru
      _
    // Predicated region
    $region6: #{tpu_custom_call.1} parent=1 // pred_check
      _
    $region7: #{tpu_custom_call.1} parent=1 // pred_check_branch
      %29 = sbr.rel (0) target = $region9
    $region8: #{tpu_custom_call.1} parent=1 // pred_region
      %s31 = ssub.s32 512, 512
      %32 = vsyncadd [#allocation6], %s31
      %s33 = sshll.u32 [#allocation5], 4
      %s34 = int_to_ptr.vmem [resolvable:$true] %s33
      %39 = dma.hbm_to_vmem [thread:$0]  %s1, 512, %s34, [#allocation6], 128, 128, 8
    $region9: #{tpu_custom_call.1} parent=1 // pred_fallthru
      _
    // Predicated region
    $region10: #{tpu_custom_call.1} parent=1 // pred_check
      _
    $region11: #{tpu_custom_call.1} parent=1 // pred_check_branch
      %41 = sbr.rel (0) target = $region13
    $region12: #{tpu_custom_call.1} parent=1 // pred_region
      _
    $region13: #{tpu_custom_call.1} parent=1 // pred_fallthru
      _
    // Predicated region
    $region14: #{tpu_custom_call.1} parent=1 // pred_check
      _
    $region15: #{tpu_custom_call.1} parent=1 // pred_check_branch
      %43 = sbr.rel (0) target = $region17
    $region16: #{tpu_custom_call.1} parent=1 // pred_region
      %s45 = ssub.s32 1024, 1024
      %46 = vsyncadd [#allocation6], %s45
      %s47 = sshll.u32 [#allocation7], 4
      %s48 = int_to_ptr.vmem [resolvable:$true] %s47
      %53 = dma.hbm_to_vmem [thread:$0]  %s3, 1024, %s48, [#allocation6], 128, 128, 8
    $region17: #{tpu_custom_call.1} parent=1 // pred_fallthru
      _
    // Predicated region
    $region18: #{tpu_custom_call.1} parent=1 // pred_check
      _
    $region19: #{tpu_custom_call.1} parent=1 // pred_check_branch
      %55 = sbr.rel (0) target = $region21
    $region20: #{tpu_custom_call.1} parent=1 // pred_region
      _
    $region21: #{tpu_custom_call.1} parent=1 // pred_fallthru
      _
    // Predicated region
    $region22: #{tpu_custom_call.1} parent=1 // pred_check
      _
    $region23: #{tpu_custom_call.1} parent=1 // pred_check_branch
      %57 = sbr.rel (0) target = $region25
    $region24: #{tpu_custom_call.1} parent=1 // pred_region
      %58 = dma.done [#allocation3], 2048
    $region25: #{tpu_custom_call.1} parent=1 // pred_fallthru
      _
    // Predicated region
    $region26: #{tpu_custom_call.1} parent=1 // pred_check
      _
    $region27: #{tpu_custom_call.1} parent=1 // pred_check_branch
      %60 = sbr.rel (0) target = $region29
    $region28: #{tpu_custom_call.1} parent=1 // pred_region
      %61 = dma.done [#allocation6], 512
    $region29: #{tpu_custom_call.1} parent=1 // pred_fallthru
      _
    // Predicated region
    $region30: #{tpu_custom_call.1} parent=1 // pred_check
      _
    $region31: #{tpu_custom_call.1} parent=1 // pred_check_branch
      %63 = sbr.rel (0) target = $region33
    $region32: #{tpu_custom_call.1} parent=1 // pred_region
      %64 = dma.done [#allocation6], 1024
    $region33: #{tpu_custom_call.1} parent=1 // pred_fallthru
      _
    %v65 = vld [vmem:[#allocation2] sm:$0xff]
    %v66 = vld [vmem:[#allocation2 + $0x8] sm:$0xff]
    %v67 = vld [vmem:[#allocation2 + $0x10] sm:$0xff]
    %v68 = vld [vmem:[#allocation2 + $0x18] sm:$0xff]
    %v69 = vld [vmem:[#allocation2 + $0x20] sm:$0xff]
    %v70 = vld [vmem:[#allocation2 + $0x28] sm:$0xff]
    %v71 = vld [vmem:[#allocation2 + $0x30] sm:$0xff]
    %v72 = vld [vmem:[#allocation2 + $0x38] sm:$0xff]
    %v73 = vld [vmem:[#allocation2 + $0x40] sm:$0xff]
    %v74 = vld [vmem:[#allocation2 + $0x48] sm:$0xff]
    %v75 = vld [vmem:[#allocation2 + $0x50] sm:$0xff]
    %v76 = vld [vmem:[#allocation2 + $0x58] sm:$0xff]
    %v77 = vld [vmem:[#allocation2 + $0x60] sm:$0xff]
    %v78 = vld [vmem:[#allocation2 + $0x68] sm:$0xff]
    %v79 = vld [vmem:[#allocation2 + $0x70] sm:$0xff]
    %v80 = vld [vmem:[#allocation2 + $0x78] sm:$0xff]
    %vm81 = vcmask 556032
    %v82 = vsel %vm81, %v66, 0.0
    %v83 = vadd.f32 %v65, %v82
    %84 = vadd.xlane.f32.xlu0 %v83
    %v85 = vpop.xlane.xlu0 %84
    %v86 = vsel %vm81, %v68, 0.0
    %v87 = vadd.f32 %v67, %v86
    %88 = vadd.xlane.f32.xlu0 %v87
    %v89 = vpop.xlane.xlu0 %88
    %v90 = vsel %vm81, %v70, 0.0
    %v91 = vadd.f32 %v69, %v90
    %92 = vadd.xlane.f32.xlu0 %v91
    %v93 = vpop.xlane.xlu0 %92
    %v94 = vsel %vm81, %v72, 0.0
    %v95 = vadd.f32 %v71, %v94
    %96 = vadd.xlane.f32.xlu0 %v95
    %v97 = vpop.xlane.xlu0 %96
    %v98 = vsel %vm81, %v74, 0.0
    %v99 = vadd.f32 %v73, %v98
    %100 = vadd.xlane.f32.xlu0 %v99
    %v101 = vpop.xlane.xlu0 %100
    %v102 = vsel %vm81, %v76, 0.0
    %v103 = vadd.f32 %v75, %v102
    %104 = vadd.xlane.f32.xlu0 %v103
    %v105 = vpop.xlane.xlu0 %104
    %v106 = vsel %vm81, %v78, 0.0
    %v107 = vadd.f32 %v77, %v106
    %108 = vadd.xlane.f32.xlu0 %v107
    %v109 = vpop.xlane.xlu0 %108
    %v110 = vsel %vm81, %v80, 0.0
    %v111 = vadd.f32 %v79, %v110
    %112 = vadd.xlane.f32.xlu0 %v111
    %v113 = vpop.xlane.xlu0 %112
    %v114 = vrcp.pop 196.0
    %v115 = vmul.f32 %v85, %v114
    %v116 = vmul.f32 %v89, %v114
    %v117 = vmul.f32 %v93, %v114
    %v118 = vmul.f32 %v97, %v114
    %v119 = vmul.f32 %v101, %v114
    %v120 = vmul.f32 %v105, %v114
    %v121 = vmul.f32 %v109, %v114
    %v122 = vmul.f32 %v113, %v114
    %v123 = vld [vmem:[#allocation5] sm:$0xff]
    %v124 = vld [vmem:[#allocation5 + $0x8] sm:$0xff]
    %v125 = vld [vmem:[#allocation5 + $0x10] sm:$0xff]
    %v126 = vld [vmem:[#allocation5 + $0x18] sm:$0xff]
    %v127 = vld [vmem:[%s2] sm:$0x1]
    %v129 = vlaneseq
    %v130 = vshrl.u32 %v129, 7
    %v131 = vsub.s32 0, %v130
    %v132 = vrot.slane %v127, %v131
    %v142 = vlaneseq
    %v143 = vand.u32 %v142, 127
    %v144 = vlaneseq
    %v145 = vshrl.u32 %v144, 7
    %v146 = vsub.s32 %v143, %v145
    %v147 = vrot.slane %v115, %v146
    %v148 = vadd.s32 %v143, 4294967288
    %v149 = vlaneseq
    %v150 = vshrl.u32 %v149, 7
    %v151 = vsub.s32 %v148, %v150
    %v152 = vrot.slane %v116, %v151
    %vm153 = vcmask 130112
    %v154 = vsel %vm153, %v152, %v147
    %v155 = vadd.s32 %v143, 4294967280
    %v156 = vlaneseq
    %v157 = vshrl.u32 %v156, 7
    %v158 = vsub.s32 %v155, %v157
    %v159 = vrot.slane %v117, %v158
    %vm160 = vcmask 195712
    %v161 = vsel %vm160, %v159, %v154
    %v162 = vadd.s32 %v143, 4294967272
    %v163 = vlaneseq
    %v164 = vshrl.u32 %v163, 7
    %v165 = vsub.s32 %v162, %v164
    %v166 = vrot.slane %v118, %v165
    %vm167 = vcmask 261312
    %v168 = vsel %vm167, %v166, %v161
    %v169 = vlaneseq
    %v170 = vshrl.u32 %v169, 7
    %v171 = vsub.s32 %v143, %v170
    %v172 = vrot.slane %v119, %v171
    %v173 = vlaneseq
    %v174 = vshrl.u32 %v173, 7
    %v175 = vsub.s32 %v148, %v174
    %v176 = vrot.slane %v120, %v175
    %v177 = vsel %vm153, %v176, %v172
    %v178 = vlaneseq
    %v179 = vshrl.u32 %v178, 7
    %v180 = vsub.s32 %v155, %v179
    %v181 = vrot.slane %v121, %v180
    %v182 = vsel %vm160, %v181, %v177
    %v183 = vlaneseq
    %v184 = vshrl.u32 %v183, 7
    %v185 = vsub.s32 %v162, %v184
    %v186 = vrot.slane %v122, %v185
    %v187 = vsel %vm167, %v186, %v182
    %vm188 = vcmask 1041409
    %v189 = vsel %vm188, %v187, %v168
    %vm190 = vcmask 261120
    %v191 = vsel %vm190, %v189, 0
    %193 = vmatprep.subr.mxu0 0.0
    %194 = vmatpush1.msra.mxu0 0.0
    %195 = vmatprep.subr.mxu0 0.0
    %196 = vmatpush1.msra.mxu0 0.0
    %197 = vmatprep.subr.mxu0 0.0
    %198 = vmatpush1.msra.mxu0 0.0
    %199 = vmatprep.subr.mxu0 0.0
    %200 = vmatpush1.msra.mxu0 0.0
    %201 = vmatprep.subr.mxu0 0.0
    %202 = vmatpush1.msra.mxu0 0.0
    %203 = vmatprep.subr.mxu0 0.0
    %204 = vmatpush1.msra.mxu0 0.0
    %205 = vmatprep.subr.mxu0 0.0
    %206 = vmatpush1.msra.mxu0 0.0
    %207 = vmatprep.subr.mxu0 0.0
    %208 = vmatpush1.msra.mxu0 0.0
    %209 = vmatprep.subr.mxu0 0.0
    %210 = vmatpush1.msra.mxu0 0.0
    %211 = vmatprep.subr.mxu0 0.0
    %212 = vmatpush1.msra.mxu0 0.0
    %213 = vmatprep.subr.mxu0 0.0
    %214 = vmatpush1.msra.mxu0 0.0
    %215 = vmatprep.subr.mxu0 0.0
    %216 = vmatpush1.msra.mxu0 0.0
    %217 = vmatprep.subr.mxu0 0.0
    %218 = vmatpush1.msra.mxu0 %v126
    %219 = vmatprep.subr.mxu0 0.0
    %220 = vmatpush1.msra.mxu0 %v125
    %221 = vmatprep.subr.mxu0 0.0
    %222 = vmatpush1.msra.mxu0 %v124
    %223 = vmatprep.subr.mxu0 0.0
    %224 = vmatpush1.msra.mxu0 %v123
    %225 = vmatprep.subr.mxu0 0.0
    %226 = vmatpush2.msra.mxu0 0.0
    %227 = vmatprep.subr.mxu0 0.0
    %228 = vmatpush2.msra.mxu0 0.0
    %229 = vmatprep.subr.mxu0 0.0
    %230 = vmatpush2.msra.mxu0 0.0
    %231 = vmatprep.subr.mxu0 0.0
    %232 = vmatpush2.msra.mxu0 0.0
    %233 = vmatprep.subr.mxu0 0.0
    %234 = vmatpush2.msra.mxu0 0.0
    %235 = vmatprep.subr.mxu0 0.0
    %236 = vmatpush2.msra.mxu0 0.0
    %237 = vmatprep.subr.mxu0 0.0
    %238 = vmatpush2.msra.mxu0 0.0
    %239 = vmatprep.subr.mxu0 0.0
    %240 = vmatpush2.msra.mxu0 0.0
    %241 = vmatprep.subr.mxu0 0.0
    %242 = vmatpush2.msra.mxu0 0.0
    %243 = vmatprep.subr.mxu0 0.0
    %244 = vmatpush2.msra.mxu0 0.0
    %245 = vmatprep.subr.mxu0 0.0
    %246 = vmatpush2.msra.mxu0 0.0
    %247 = vmatprep.subr.mxu0 0.0
    %248 = vmatpush2.msra.mxu0 0.0
    %249 = vmatprep.subr.mxu0 0.0
    %250 = vmatpush2.msra.mxu0 0.0
    %251 = vmatprep.subr.mxu0 0.0
    %252 = vmatpush2.msra.mxu0 0.0
    %253 = vmatprep.subr.mxu0 0.0
    %254 = vmatpush2.msra.mxu0 0.0
    %255 = vmatprep.subr.mxu0 0.0
    %256 = vmatpush2.msra.mxu0 0.0
    %257 = vmatprep.mubr.f32.mxu0 0.0
    %258 = vmatmul.mubr.f32.gmra.mxu0 %v191
    %v259 = vpop.f32.mrf.mxu0
    %v260 = vadd.f32 %v132, %v259
    %v261 = vpop.f32.mrf.mxu0
    %262 = vdwg.mxu0
    %v263 = vxor.u32 %v260, 2147483648
    %v264 = vmul.f32 %v263, 1.442695
    %v265 = vpow.pop %v264
    %v266 = vadd.f32 %v265, 1.0
    %v267 = vrcp.pop %v266
    %v268 = vmul.f32 1.0, %v267
    %v269 = vld [vmem:[#allocation7] sm:$0xff]
    %v270 = vld [vmem:[#allocation7 + $0x8] sm:$0xff]
    %v271 = vld [vmem:[#allocation7 + $0x10] sm:$0xff]
    %v272 = vld [vmem:[#allocation7 + $0x18] sm:$0xff]
    %v273 = vld [vmem:[#allocation7 + $0x20] sm:$0xff]
    %v274 = vld [vmem:[#allocation7 + $0x28] sm:$0xff]
    %v275 = vld [vmem:[#allocation7 + $0x30] sm:$0xff]
    %v276 = vld [vmem:[#allocation7 + $0x38] sm:$0xff]
    %v277 = vld [vmem:[%s4] sm:$0x1]
    %v279 = vlaneseq
    %v280 = vshrl.u32 %v279, 7
    %v281 = vsub.s32 0, %v280
    %v282 = vrot.slane %v277, %v281
    %vm284 = vcmask 523264
    %v286 = vsel %vm284, %v268, 0
    %288 = vmatprep.subr.mxu0 0.0
    %289 = vmatpush1.msra.mxu0 0.0
    %290 = vmatprep.subr.mxu0 0.0
    %291 = vmatpush1.msra.mxu0 0.0
    %292 = vmatprep.subr.mxu0 0.0
    %293 = vmatpush1.msra.mxu0 0.0
    %294 = vmatprep.subr.mxu0 0.0
    %295 = vmatpush1.msra.mxu0 0.0
    %296 = vmatprep.subr.mxu0 0.0
    %297 = vmatpush1.msra.mxu0 0.0
    %298 = vmatprep.subr.mxu0 0.0
    %299 = vmatpush1.msra.mxu0 0.0
    %300 = vmatprep.subr.mxu0 0.0
    %301 = vmatpush1.msra.mxu0 0.0
    %302 = vmatprep.subr.mxu0 0.0
    %303 = vmatpush1.msra.mxu0 0.0
    %304 = vmatprep.subr.mxu0 0.0
    %305 = vmatpush1.msra.mxu0 %v276
    %306 = vmatprep.subr.mxu0 0.0
    %307 = vmatpush1.msra.mxu0 %v275
    %308 = vmatprep.subr.mxu0 0.0
    %309 = vmatpush1.msra.mxu0 %v274
    %310 = vmatprep.subr.mxu0 0.0
    %311 = vmatpush1.msra.mxu0 %v273
    %312 = vmatprep.subr.mxu0 0.0
    %313 = vmatpush1.msra.mxu0 %v272
    %314 = vmatprep.subr.mxu0 0.0
    %315 = vmatpush1.msra.mxu0 %v271
    %316 = vmatprep.subr.mxu0 0.0
    %317 = vmatpush1.msra.mxu0 %v270
    %318 = vmatprep.subr.mxu0 0.0
    %319 = vmatpush1.msra.mxu0 %v269
    %320 = vmatprep.subr.mxu0 0.0
    %321 = vmatpush2.msra.mxu0 0.0
    %322 = vmatprep.subr.mxu0 0.0
    %323 = vmatpush2.msra.mxu0 0.0
    %324 = vmatprep.subr.mxu0 0.0
    %325 = vmatpush2.msra.mxu0 0.0
    %326 = vmatprep.subr.mxu0 0.0
    %327 = vmatpush2.msra.mxu0 0.0
    %328 = vmatprep.subr.mxu0 0.0
    %329 = vmatpush2.msra.mxu0 0.0
    %330 = vmatprep.subr.mxu0 0.0
    %331 = vmatpush2.msra.mxu0 0.0
    %332 = vmatprep.subr.mxu0 0.0
    %333 = vmatpush2.msra.mxu0 0.0
    %334 = vmatprep.subr.mxu0 0.0
    %335 = vmatpush2.msra.mxu0 0.0
    %336 = vmatprep.subr.mxu0 0.0
    %337 = vmatpush2.msra.mxu0 0.0
    %338 = vmatprep.subr.mxu0 0.0
    %339 = vmatpush2.msra.mxu0 0.0
    %340 = vmatprep.subr.mxu0 0.0
    %341 = vmatpush2.msra.mxu0 0.0
    %342 = vmatprep.subr.mxu0 0.0
    %343 = vmatpush2.msra.mxu0 0.0
    %344 = vmatprep.subr.mxu0 0.0
    %345 = vmatpush2.msra.mxu0 0.0
    %346 = vmatprep.subr.mxu0 0.0
    %347 = vmatpush2.msra.mxu0 0.0
    %348 = vmatprep.subr.mxu0 0.0
    %349 = vmatpush2.msra.mxu0 0.0
    %350 = vmatprep.subr.mxu0 0.0
    %351 = vmatpush2.msra.mxu0 0.0
    %352 = vmatprep.mubr.f32.mxu0 0.0
    %353 = vmatmul.mubr.f32.gmra.mxu0 %v286
    %v354 = vpop.f32.mrf.mxu0
    %v355 = vadd.f32 %v282, %v354
    %v356 = vpop.f32.mrf.mxu0
    %357 = vdwg.mxu0
    %v358 = vxor.u32 %v355, 2147483648
    %v359 = vmul.f32 %v358, 1.442695
    %v360 = vpow.pop %v359
    %v361 = vadd.f32 %v360, 1.0
    %v362 = vrcp.pop %v361
    %v363 = vmul.f32 1.0, %v362
    %364 = vst [vmem:[#allocation8] sm:$0x3] %v363
    %366 = vrot.lane.b32.xlu0 %v363, 96
    %v367 = vpop.permute.xlu0 %366
    %369 = vrot.lane.b32.xlu0 %v363, 64
    %v370 = vpop.permute.xlu0 %369
    %372 = vrot.lane.b32.xlu0 %v363, 32
    %v373 = vpop.permute.xlu0 %372
    %v375 = vcombine.low %v363, %v370
    %v377 = vunpack.c.l.s4 1983009808
    %v378 = vunpack.c.0.s8 %v377
    %v379 = vlaneseq
    %v380 = vshrl.u32 %v379, 7
    %v381 = vsub.s32 %v378, %v380
    %v382 = vrot.slane %v375, %v381
    %v383 = vcombine.low %v367, %v373
    %v385 = vunpack.c.l.s4 1983009808
    %v386 = vunpack.c.0.s8 %v385
    %v387 = vlaneseq
    %v388 = vshrl.u32 %v387, 7
    %v389 = vsub.s32 %v386, %v388
    %v390 = vrot.slane %v383, %v389
    %v391 = vcombine.low %v382, %v390
    %v393 = vunpack.c.l.s4 1934713408
    %v394 = vunpack.c.0.s8 %v393
    %v395 = vlaneseq
    %v396 = vshrl.u32 %v395, 7
    %v397 = vsub.s32 %v394, %v396
    %v398 = vrot.slane %v391, %v397
    %v399 = vcombine.high %v398, 0.0
    %v400 = vmul.f32 %v398, 0.03125
    %v401 = vmul.f32 %v399, 0.03125
    %v403 = vsel %vm190, %v400, 0
    %405 = vmatprep.subr.mxu0 0.0
    %406 = vmatpush1.msra.mxu0 0.0
    %407 = vmatprep.subr.mxu0 0.0
    %408 = vmatpush1.msra.mxu0 0.0
    %409 = vmatprep.subr.mxu0 0.0
    %410 = vmatpush1.msra.mxu0 0.0
    %411 = vmatprep.subr.mxu0 0.0
    %412 = vmatpush1.msra.mxu0 0.0
    %413 = vmatprep.subr.mxu0 0.0
    %414 = vmatpush1.msra.mxu0 0.0
    %415 = vmatprep.subr.mxu0 0.0
    %416 = vmatpush1.msra.mxu0 0.0
    %417 = vmatprep.subr.mxu0 0.0
    %418 = vmatpush1.msra.mxu0 0.0
    %419 = vmatprep.subr.mxu0 0.0
    %420 = vmatpush1.msra.mxu0 0.0
    %421 = vmatprep.subr.mxu0 0.0
    %422 = vmatpush1.msra.mxu0 0.0
    %423 = vmatprep.subr.mxu0 0.0
    %424 = vmatpush1.msra.mxu0 0.0
    %425 = vmatprep.subr.mxu0 0.0
    %426 = vmatpush1.msra.mxu0 0.0
    %427 = vmatprep.subr.mxu0 0.0
    %428 = vmatpush1.msra.mxu0 0.0
    %429 = vmatprep.subr.mxu0 %v72
    %430 = vmatpush1.msra.mxu0 %v71
    %431 = vmatprep.subr.mxu0 %v70
    %432 = vmatpush1.msra.mxu0 %v69
    %433 = vmatprep.subr.mxu0 %v68
    %434 = vmatpush1.msra.mxu0 %v67
    %435 = vmatprep.subr.mxu0 %v66
    %436 = vmatpush1.msra.mxu0 %v65
    %437 = vmatprep.subr.mxu0 0.0
    %438 = vmatpush2.msra.mxu0 0.0
    %439 = vmatprep.subr.mxu0 0.0
    %440 = vmatpush2.msra.mxu0 0.0
    %441 = vmatprep.subr.mxu0 0.0
    %442 = vmatpush2.msra.mxu0 0.0
    %443 = vmatprep.subr.mxu0 0.0
    %444 = vmatpush2.msra.mxu0 0.0
    %445 = vmatprep.subr.mxu0 0.0
    %446 = vmatpush2.msra.mxu0 0.0
    %447 = vmatprep.subr.mxu0 0.0
    %448 = vmatpush2.msra.mxu0 0.0
    %449 = vmatprep.subr.mxu0 0.0
    %450 = vmatpush2.msra.mxu0 0.0
    %451 = vmatprep.subr.mxu0 0.0
    %452 = vmatpush2.msra.mxu0 0.0
    %453 = vmatprep.subr.mxu0 0.0
    %454 = vmatpush2.msra.mxu0 0.0
    %455 = vmatprep.subr.mxu0 0.0
    %456 = vmatpush2.msra.mxu0 0.0
    %457 = vmatprep.subr.mxu0 0.0
    %458 = vmatpush2.msra.mxu0 0.0
    %459 = vmatprep.subr.mxu0 0.0
    %460 = vmatpush2.msra.mxu0 0.0
    %461 = vmatprep.subr.mxu0 0.0
    %462 = vmatpush2.msra.mxu0 0.0
    %463 = vmatprep.subr.mxu0 0.0
    %464 = vmatpush2.msra.mxu0 0.0
    %465 = vmatprep.subr.mxu0 0.0
    %466 = vmatpush2.msra.mxu0 0.0
    %467 = vmatprep.subr.mxu0 0.0
    %468 = vmatpush2.msra.mxu0 0.0
    %469 = vmatprep.mubr.f32.mxu0 0.0
    %470 = vmatmul.mubr.f32.gmra.mxu0 %v403
    %v471 = vpop.f32.mrf.mxu0
    %v472 = vadd.f32 0.0, %v471
    %v473 = vpop.f32.mrf.mxu0
    %v474 = vadd.f32 0.0, %v473
    %475 = vdwg.mxu0
    %v477 = vsel %vm190, %v401, 0
    %479 = vmatprep.subr.mxu0 0.0
    %480 = vmatpush1.msra.mxu0 0.0
    %481 = vmatprep.subr.mxu0 0.0
    %482 = vmatpush1.msra.mxu0 0.0
    %483 = vmatprep.subr.mxu0 0.0
    %484 = vmatpush1.msra.mxu0 0.0
    %485 = vmatprep.subr.mxu0 0.0
    %486 = vmatpush1.msra.mxu0 0.0
    %487 = vmatprep.subr.mxu0 0.0
    %488 = vmatpush1.msra.mxu0 0.0
    %489 = vmatprep.subr.mxu0 0.0
    %490 = vmatpush1.msra.mxu0 0.0
    %491 = vmatprep.subr.mxu0 0.0
    %492 = vmatpush1.msra.mxu0 0.0
    %493 = vmatprep.subr.mxu0 0.0
    %494 = vmatpush1.msra.mxu0 0.0
    %495 = vmatprep.subr.mxu0 0.0
    %496 = vmatpush1.msra.mxu0 0.0
    %497 = vmatprep.subr.mxu0 0.0
    %498 = vmatpush1.msra.mxu0 0.0
    %499 = vmatprep.subr.mxu0 0.0
    %500 = vmatpush1.msra.mxu0 0.0
    %501 = vmatprep.subr.mxu0 0.0
    %502 = vmatpush1.msra.mxu0 0.0
    %503 = vmatprep.subr.mxu0 %v80
    %504 = vmatpush1.msra.mxu0 %v79
    %505 = vmatprep.subr.mxu0 %v78
    %506 = vmatpush1.msra.mxu0 %v77
    %507 = vmatprep.subr.mxu0 %v76
    %508 = vmatpush1.msra.mxu0 %v75
    %509 = vmatprep.subr.mxu0 %v74
    %510 = vmatpush1.msra.mxu0 %v73
    %511 = vmatprep.subr.mxu0 0.0
    %512 = vmatpush2.msra.mxu0 0.0
    %513 = vmatprep.subr.mxu0 0.0
    %514 = vmatpush2.msra.mxu0 0.0
    %515 = vmatprep.subr.mxu0 0.0
    %516 = vmatpush2.msra.mxu0 0.0
    %517 = vmatprep.subr.mxu0 0.0
    %518 = vmatpush2.msra.mxu0 0.0
    %519 = vmatprep.subr.mxu0 0.0
    %520 = vmatpush2.msra.mxu0 0.0
    %521 = vmatprep.subr.mxu0 0.0
    %522 = vmatpush2.msra.mxu0 0.0
    %523 = vmatprep.subr.mxu0 0.0
    %524 = vmatpush2.msra.mxu0 0.0
    %525 = vmatprep.subr.mxu0 0.0
    %526 = vmatpush2.msra.mxu0 0.0
    %527 = vmatprep.subr.mxu0 0.0
    %528 = vmatpush2.msra.mxu0 0.0
    %529 = vmatprep.subr.mxu0 0.0
    %530 = vmatpush2.msra.mxu0 0.0
    %531 = vmatprep.subr.mxu0 0.0
    %532 = vmatpush2.msra.mxu0 0.0
    %533 = vmatprep.subr.mxu0 0.0
    %534 = vmatpush2.msra.mxu0 0.0
    %535 = vmatprep.subr.mxu0 0.0
    %536 = vmatpush2.msra.mxu0 0.0
    %537 = vmatprep.subr.mxu0 0.0
    %538 = vmatpush2.msra.mxu0 0.0
    %539 = vmatprep.subr.mxu0 0.0
    %540 = vmatpush2.msra.mxu0 0.0
    %541 = vmatprep.subr.mxu0 0.0
    %542 = vmatpush2.msra.mxu0 0.0
    %543 = vmatprep.mubr.f32.mxu0 0.0
    %544 = vmatmul.mubr.f32.gmra.mxu0 %v477
    %v545 = vpop.f32.mrf.mxu0
    %v546 = vadd.f32 0.0, %v545
    %v547 = vpop.f32.mrf.mxu0
    %v548 = vadd.f32 0.0, %v547
    %549 = vdwg.mxu0
    %v554 = vcombine.low %v472, %v474
    %v555 = vcombine.low %v546, %v548
    %vm558 = vcmask 1043456
    %vm559 = vcmask 556036
    %vm560 = vmor %vm559, %vm558
    %561 = vst.msk [vmem:[#allocation9] sm:$0xff] %vm560, %v554
    %562 = vst.msk [vmem:[#allocation9 + $0x8] sm:$0xff] %vm560, %v555
    // Predicated region
    $region34: #{tpu_custom_call.1} parent=1 // pred_check
      _
    $region35: #{tpu_custom_call.1} parent=1 // pred_check_branch
      %564 = sbr.rel (0) target = $region37
    $region36: #{tpu_custom_call.1} parent=1 // pred_region
      %s566 = ssub.s32 32, 32
      %567 = vsyncadd [#allocation4], %s566
      %s569 = sshll.u32 [#allocation8], 4
      %s570 = int_to_ptr.vmem [resolvable:$true] %s569
      %572 = dma.vmem_to_hbm [thread:$0]  %s570, 32, %s5, [#allocation4]
    $region37: #{tpu_custom_call.1} parent=1 // pred_fallthru
      _
    // Predicated region
    $region38: #{tpu_custom_call.1} parent=1 // pred_check
      _
    $region39: #{tpu_custom_call.1} parent=1 // pred_check_branch
      %574 = sbr.rel (0) target = $region41
    $region40: #{tpu_custom_call.1} parent=1 // pred_region
      %s576 = ssub.s32 256, 256
      %577 = vsyncadd [#allocation10], %s576
      %s578 = sshll.u32 [#allocation9], 4
      %s579 = int_to_ptr.vmem [resolvable:$true] %s578
      %584 = dma.vmem_to_hbm [thread:$0]  %s579, 256, %s6, [#allocation10], 128, 128, 8
    $region41: #{tpu_custom_call.1} parent=1 // pred_fallthru
      _
    // Predicated region
    $region42: #{tpu_custom_call.1} parent=1 // pred_check
      _
    $region43: #{tpu_custom_call.1} parent=1 // pred_check_branch
      %586 = sbr.rel (0) target = $region45
    $region44: #{tpu_custom_call.1} parent=1 // pred_region
      %587 = dma.done [#allocation4], 32
    $region45: #{tpu_custom_call.1} parent=1 // pred_fallthru
      _
    // Predicated region
    $region46: #{tpu_custom_call.1} parent=1 // pred_check
      _
    $region47: #{tpu_custom_call.1} parent=1 // pred_check_branch
      %589 = sbr.rel (0) target = $region49
    $region48: #{tpu_custom_call.1} parent=1 // pred_region
      %590 = dma.done [#allocation10], 256
    $region49: #{tpu_custom_call.1} parent=1 // pred_fallthru
      _
    %591 = vsyncpa [#allocation3], 1
    %592 = vsyncpa [#allocation6], 1
    %593 = vsyncpa [#allocation4], 1
    %594 = vsyncpa [#allocation10], 1

</llo_original>
